<compile_context>
chip_gen: v6e
topology: v6e:2x2x1
jax: 0.10.0
libtpu: 0.0.40
codegen_flags: <defaults>
</compile_context>

<pallas_src>
import functools

import jax
import jax.numpy as jnp
from jax.experimental import pallas as pl
from jax.experimental.pallas import tpu as pltpu


_LANE = 128
_TILE_QUANTUM = 256              # batch-tile granularity (sublane & lane aligned)
_MIN_TILE = 256                  # floor: avoid tiny tiles / partial stores
_VMEM_BUDGET_BYTES = 40 << 20    # double-buffer budget (fits v7x 64 MiB w/ headroom)
_VMEM_LIMIT_CAP = 56 << 20       # never request more scoped VMEM than v7x offers


def _round_up(n, m):
    return ((n + m - 1) // m) * m


def predictor_kernel(x_ref, w1_ref, b1_ref, w2_ref, b2_ref, out_ref, *,
                     matmul_dtype):
    # ----- Layer 1: Linear(input_dim, H) + ReLU -----------------------------
    # MXU matmul; w1 was pre-cast in the wrapper, only the streamed x tile is
    # cast here.  Always f32 accumulation; bias + ReLU stay f32 on the VPU.
    h = jnp.dot(x_ref[...].astype(matmul_dtype), w1_ref[...],
                preferred_element_type=jnp.float32)
    h = jnp.maximum(h + b1_ref[...], 0.0)                      # (tb, Hp) f32

    # Dropout: identity in eval mode (PyTorch nn.Dropout at inference).
    # TODO(synk): training-mode dropout (pltpu.prng_seed + stateful_bernoulli
    #             + 1/(1-p) rescale) if training semantics are ever needed.

    # ----- Layer 2: Linear(H, 1) + Sigmoid, lane-dense output ---------------
    # w2_row @ h^T -> (1, tb): the result is already a lane-dense row, so the
    # store is a full-width vst (no masked 1-lane stores) and the sigmoid runs
    # on dense vregs.  The MXU is idle in this HBM-bound kernel, so the extra
    # N/T pass is free.  Padded hidden lanes contribute exactly 0.
    z = jax.lax.dot_general(
        w2_ref[...], h,
        dimension_numbers=(((1,), (1,)), ((), ())),
        preferred_element_type=jnp.float32,
    ) + b2_ref[0, 0]                                           # (1, tb)
    out_ref[...] = jax.nn.sigmoid(z)


def _select_tile(B, D, Hp, x_itemsize, w1_itemsize, tile_b):
    """Pick a batch tile size under the double-buffered VMEM budget."""
    # 2 buffers for the VMEM-resident weights (w1 + b1 + w2_row).
    weight_bytes = 2 * (D * Hp * w1_itemsize + 2 * Hp * 4)
    # Per batch row: double-buffered x tile row + double-buffered output elem.
    per_row = 2 * (D * x_itemsize + 4)
    cap = max(_MIN_TILE,
              ((_VMEM_BUDGET_BYTES - weight_bytes) // max(per_row, 1))
              // _TILE_QUANTUM * _TILE_QUANTUM)
    tb = max(_MIN_TILE, min(_round_up(tile_b, _TILE_QUANTUM), cap))
    if B <= tb:
        if B >= 2 * _MIN_TILE:
            # Keep >= 2 tiles so both v7x TensorCores share the parallel axis.
            tb = _round_up(pl.cdiv(B, 2), _TILE_QUANTUM)
        else:
            # Tiny batch: single tile with a floor (padding cost negligible).
            tb = _MIN_TILE
    return tb, weight_bytes, per_row


def predictor_forward(x, w1, b1, w2, b2, *, tile_b=2048,
                      matmul_dtype=jnp.float32, x_buffers=2):
    """x: (B, input_dim) f32 (or bf16) -> (B, 1) f32.

    Weights are stored transposed relative to PyTorch, i.e. w1: (in, hidden),
    w2: (hidden, 1), so the kernel computes plain x @ W + b.

    matmul_dtype=jnp.float32 (default) matches the PyTorch f32 module exactly;
    jnp.bfloat16 is the fast path (bf16 MXU inputs, f32 accumulation).  bf16 x
    is consumed directly -- no wrapper-side cast pass is added.
    """
    B, D = x.shape
    H = w1.shape[1]
    assert w1.shape == (D, H)
    assert b1.shape == (1, H)
    assert w2.shape == (H, 1)
    assert b2.shape == (1, 1)

    # ---- Pad hidden dim to a lane multiple (exact: padded w1 columns / b1
    #      entries / w2 rows are zero, so ReLU(0) * 0 adds 0).
    Hp = _round_up(H, _LANE)
    if Hp != H:
        w1 = jnp.pad(w1, ((0, 0), (0, Hp - H)))
        b1 = jnp.pad(b1, ((0, 0), (0, Hp - H)))
        w2 = jnp.pad(w2, ((0, Hp - H), (0, 0)))

    # Pre-cast the VMEM-resident weights once here (avoids a per-tile VPU
    # re-cast in the kernel; halves w1 HBM/VMEM bytes on the bf16 path).
    w1 = w1.astype(matmul_dtype)
    b1 = b1.astype(jnp.float32)
    w2_row = w2.reshape(1, Hp).astype(jnp.float32)
    b2 = b2.astype(jnp.float32)

    # ---- Batch tiling under the VMEM budget.
    tb, weight_bytes, per_row = _select_tile(
        B, D, Hp, x.dtype.itemsize, w1.dtype.itemsize, tile_b)
    Bp = _round_up(B, tb)
    if Bp != B:
        x = jnp.pad(x, ((0, Bp - B), (0, 0)))
    num_tiles = Bp // tb

    vmem_need = weight_bytes + tb * per_row
    vmem_limit = int(min(_VMEM_LIMIT_CAP, max(vmem_need + (4 << 20), 16 << 20)))

    x_spec_kwargs = {}
    if x_buffers != 2:
        # Sweep knob: deeper x pipeline hides DMA issue latency on tiny tiles.
        x_spec_kwargs["pipeline_mode"] = pl.Buffered(x_buffers)

    out = pl.pallas_call(
        functools.partial(predictor_kernel, matmul_dtype=matmul_dtype),
        out_shape=jax.ShapeDtypeStruct((1, Bp), jnp.float32),
        grid=(num_tiles,),
        in_specs=[
            # x: streamed tile-by-tile (double-buffered by the pipeline).
            pl.BlockSpec((tb, D), lambda i: (i, 0), **x_spec_kwargs),
            # Weights / biases: constant index_map -> stay VMEM-resident.
            pl.BlockSpec((D, Hp), lambda i: (0, 0)),
            pl.BlockSpec((1, Hp), lambda i: (0, 0)),
            pl.BlockSpec((1, Hp), lambda i: (0, 0)),
            # b2 is a single scalar: keep it in SMEM, no padded VMEM tile.
            pl.BlockSpec(memory_space=pltpu.MemorySpace.SMEM),
        ],
        # Lane-dense output: one (1, Bp) row; each grid step writes its
        # (1, tb) lane slab (full-width stores instead of masked vst.msk).
        out_specs=pl.BlockSpec((1, tb), lambda i: (0, i)),
        compiler_params=pltpu.CompilerParams(
            dimension_semantics=("parallel",),
            vmem_limit_bytes=vmem_limit,
        ),
    )(x, w1, b1, w2_row, b2)

    return out[0, :B].reshape(B, 1)


def init_params(key, input_dim, hidden=100):
    """Deterministic parameter init mirroring nn.Linear shapes.

    PyTorch stores Linear weight as (out, in); we keep (in, out) for the
    kernel's x @ W convention.
    """
    k1, k2, k3, k4 = jax.random.split(key, 4)
    bound1 = 1.0 / jnp.sqrt(input_dim)
    bound2 = 1.0 / jnp.sqrt(hidden)
    w1 = jax.random.uniform(k1, (input_dim, hidden), jnp.float32, -bound1, bound1)
    b1 = jax.random.uniform(k2, (1, hidden), jnp.float32, -bound1, bound1)
    w2 = jax.random.uniform(k3, (hidden, 1), jnp.float32, -bound2, bound2)
    b2 = jax.random.uniform(k4, (1, 1), jnp.float32, -bound2, bound2)
    return w1, b1, w2, b2


if __name__ == "__main__":
    key = jax.random.PRNGKey(0)
    k_x, k_p, k_x2 = jax.random.split(key, 3)

    input_dim, hidden = 32, 100
    w1, b1, w2, b2 = init_params(k_p, input_dim, hidden)

    def reference(xv):
        # Plain-JAX reference with eval-mode dropout semantics.
        return jax.nn.sigmoid(jnp.maximum(xv @ w1 + b1, 0.0) @ w2 + b2)

    # Small batch, single tile, exact f32 matmul path (tight tolerance).
    x_small = jax.random.normal(k_x, (8, input_dim), jnp.float32)
    out_f32 = jax.block_until_ready(predictor_forward(x_small, w1, b1, w2, b2))
    assert out_f32.shape == (8, 1)
    assert jnp.allclose(out_f32, reference(x_small), atol=1e-5, rtol=1e-5)

    # Larger batch: exercises the multi-tile grid (2 tiles of 512), batch
    # padding and the bf16 MXU fast path.
    x_big = jax.random.normal(k_x2, (640, input_dim), jnp.float32)
    out_bf16 = jax.block_until_ready(
        predictor_forward(x_big, w1, b1, w2, b2, matmul_dtype=jnp.bfloat16))
    assert out_bf16.shape == (640, 1)
    assert jnp.allclose(out_bf16, reference(x_big), atol=2e-2, rtol=2e-2)

    print("KERNEL_OK")
</pallas_src>

<mosaic_0001>
module attributes {stable_mosaic.version = 11 : i64} {
  func.func @predictor_kernel(%arg0: i32, %arg1: memref<256x32xf32, #tpu.memory_space<vmem>>, %arg2: memref<32x128xf32, #tpu.memory_space<vmem>>, %arg3: memref<1x128xf32, #tpu.memory_space<vmem>>, %arg4: memref<1x128xf32, #tpu.memory_space<vmem>>, %arg5: memref<1x1xf32, #tpu.memory_space<smem>>, %arg6: memref<1x256xf32, #tpu.memory_space<vmem>>) attributes {dimension_semantics = [#tpu.dimension_semantics<parallel>], iteration_bounds = array<i64: 1>, scalar_prefetch = 0 : i64, scratch_operands = 0 : i64, tpu.core_type = #tpu.core_type<tc>, window_params = [{transform_indices = @transform_0, window_bounds = array<i64: 256, 32>}, {pipeline_mode = #tpu.pipeline_mode<synchronous>, transform_indices = @transform_1, window_bounds = array<i64: 32, 128>}, {pipeline_mode = #tpu.pipeline_mode<synchronous>, transform_indices = @transform_2, window_bounds = array<i64: 1, 128>}, {pipeline_mode = #tpu.pipeline_mode<synchronous>, transform_indices = @transform_3, window_bounds = array<i64: 1, 128>}, {transform_indices = @transform_4, window_bounds = array<i64: 1, 1>}, {transform_indices = @transform_5, window_bounds = array<i64: 1, 256>}]} {
    %c0 = arith.constant 0 : index
    %c0_0 = arith.constant 0 : index
    %0 = vector.load %arg1[%c0, %c0_0] : memref<256x32xf32, #tpu.memory_space<vmem>>, vector<256x32xf32>
    %c0_1 = arith.constant 0 : index
    %c0_2 = arith.constant 0 : index
    %1 = vector.load %arg2[%c0_1, %c0_2] : memref<32x128xf32, #tpu.memory_space<vmem>>, vector<32x128xf32>
    %cst = arith.constant dense<0.000000e+00> : vector<256x128xf32>
    %2 = tpu.matmul %0, %1, %cst {dimension_numbers = #tpu.dot_dimension_numbers<[1], [0], [0], [1], [0, 0, 1, 1], [], []>} : vector<256x32xf32>, vector<32x128xf32>, vector<256x128xf32> -> vector<256x128xf32>
    %c0_3 = arith.constant 0 : index
    %c0_4 = arith.constant 0 : index
    %3 = vector.load %arg3[%c0_3, %c0_4] : memref<1x128xf32, #tpu.memory_space<vmem>>, vector<1x128xf32>
    %4 = vector.broadcast %3 : vector<1x128xf32> to vector<256x128xf32>
    %5 = arith.addf %2, %4 : vector<256x128xf32>
    %cst_5 = arith.constant 0.000000e+00 : f32
    %6 = vector.broadcast %cst_5 : f32 to vector<256x128xf32>
    %7 = arith.maximumf %5, %6 : vector<256x128xf32>
    %c0_6 = arith.constant 0 : index
    %c0_7 = arith.constant 0 : index
    %8 = vector.load %arg4[%c0_6, %c0_7] : memref<1x128xf32, #tpu.memory_space<vmem>>, vector<1x128xf32>
    %cst_8 = arith.constant dense<0.000000e+00> : vector<1x256xf32>
    %9 = tpu.matmul %8, %7, %cst_8 {dimension_numbers = #tpu.dot_dimension_numbers<[1], [1], [0], [0], [0, 0, 1, 0], [], []>} : vector<1x128xf32>, vector<256x128xf32>, vector<1x256xf32> -> vector<1x256xf32>
    %c0_9 = arith.constant 0 : index
    %c0_10 = arith.constant 0 : index
    %10 = memref.load %arg5[%c0_9, %c0_10] : memref<1x1xf32, #tpu.memory_space<smem>>
    %11 = vector.broadcast %10 : f32 to vector<1x256xf32>
    %12 = arith.addf %9, %11 : vector<1x256xf32>
    %13 = arith.negf %12 : vector<1x256xf32>
    %14 = math.exp %13 : vector<1x256xf32>
    %cst_11 = arith.constant 1.000000e+00 : f32
    %15 = vector.broadcast %cst_11 : f32 to vector<1x256xf32>
    %16 = arith.addf %15, %14 : vector<1x256xf32>
    %17 = arith.divf %15, %16 : vector<1x256xf32>
    %c0_12 = arith.constant 0 : index
    %c0_13 = arith.constant 0 : index
    %18 = vector.load %arg6[%c0_12, %c0_13] : memref<1x256xf32, #tpu.memory_space<vmem>>, vector<1x256xf32>
    tpu.vector_store %arg6[%c0_12, %c0_13], %17 {strides = array<i32>} : memref<1x256xf32, #tpu.memory_space<vmem>>, vector<1x256xf32>,
    return
  }
  func.func @transform_0(%arg0: i32) -> (i32, i32) {
    %c0_i32 = arith.constant 0 : i32
    %c0_i32_0 = arith.constant 0 : i32
    return %arg0, %c0_i32 : i32, i32
  }
  func.func @transform_1(%arg0: i32) -> (i32, i32) {
    %c0_i32 = arith.constant 0 : i32
    %c0_i32_0 = arith.constant 0 : i32
    %c0_i32_1 = arith.constant 0 : i32
    return %c0_i32, %c0_i32_0 : i32, i32
  }
  func.func @transform_2(%arg0: i32) -> (i32, i32) {
    %c0_i32 = arith.constant 0 : i32
    %c0_i32_0 = arith.constant 0 : i32
    %c0_i32_1 = arith.constant 0 : i32
    return %c0_i32, %c0_i32_0 : i32, i32
  }
  func.func @transform_3(%arg0: i32) -> (i32, i32) {
    %c0_i32 = arith.constant 0 : i32
    %c0_i32_0 = arith.constant 0 : i32
    %c0_i32_1 = arith.constant 0 : i32
    return %c0_i32, %c0_i32_0 : i32, i32
  }
  func.func @transform_4(%arg0: i32) -> (i32, i32) {
    %c0_i32 = arith.constant 0 : i32
    %c0_i32_0 = arith.constant 0 : i32
    %c0_i32_1 = arith.constant 0 : i32
    return %c0_i32, %c0_i32_0 : i32, i32
  }
  func.func @transform_5(%arg0: i32) -> (i32, i32) {
    %c0_i32 = arith.constant 0 : i32
    %c0_i32_0 = arith.constant 0 : i32
    return %c0_i32, %arg0 : i32, i32
  }
}

</mosaic_0001>

<llo_original>
// kernel: tpu_custom_call.1
$region0: #{tpu_custom_call.1}
  #allocation0 [shape = 'u32[]', space=smem, size = 0x4, offset = 0x4, fixed_abs, tag = 'smem constant byte address 0x4 - core index']
  #allocation1 [shape = 'u32[144,128]{1,0:T(1,128)}', space=vmem, size = 0x12000, scoped, tag = 'internal scratch']
  #allocation2 [shape = 'f32[1,1]{1,0:T(1,128)S(6)}', space=smem, size = 0x200, scoped, tag = 'scoped memory for tpu_custom_call.1']
  %s0 = inlined_call_operand.vmem [shape: f32[256,32], index: 0, kind: input, shape index: {}]
  %s1 = inlined_call_operand.vmem [shape: f32[32,128], index: 1, kind: input, shape index: {}]
  %s2 = inlined_call_operand.vmem [shape: f32[1,128], index: 2, kind: input, shape index: {}]
  %s3 = inlined_call_operand.vmem [shape: f32[1,128], index: 3, kind: input, shape index: {}]
  %s4 = inlined_call_operand.<no memory space> [shape: f32[1,1], index: 4, kind: input, shape index: {}]
  %s5 = inlined_call_operand.hbm [shape: f32[1,256], index: 5, kind: output, shape index: {}]
  %s6 = sld [smem:[#allocation0]]
  $region30: #{tpu_custom_call.1} parent=0
    _
  %s8 = ssub.s32 1, %s6
  %s9 = scalar_select 0, %s8, %s6
  %10 = sst [smem:[#allocation2]] %s4
  $region1: #{tpu_custom_call.1} parent=0
    #allocation3 [shape = 'u8[1024]{0}', space=vmem, size = 0x400, scoped, tag = 'output window, operand 0, single buffered']
    #allocation4 [shape = 's32[1]{0}', space=sflag, size = 0x4, scoped, tag = 'scoped memory for tpu_custom_call.1']
    %11 = vsyncpa [#allocation4], 0
    // Predicated region
    $region2: #{tpu_custom_call.1} parent=1 // pred_check
      _
    $region3: #{tpu_custom_call.1} parent=1 // pred_check_branch
      %13 = sbr.rel (0) target = $region5
    $region4: #{tpu_custom_call.1} parent=1 // pred_region
      _
    $region5: #{tpu_custom_call.1} parent=1 // pred_fallthru
      _
    // Predicated region
    $region6: #{tpu_custom_call.1} parent=1 // pred_check
      _
    $region7: #{tpu_custom_call.1} parent=1 // pred_check_branch
      %15 = sbr.rel (0) target = $region9
    $region8: #{tpu_custom_call.1} parent=1 // pred_region
      _
    $region9: #{tpu_custom_call.1} parent=1 // pred_fallthru
      _
    // Predicated region
    $region10: #{tpu_custom_call.1} parent=1 // pred_check
      _
    $region11: #{tpu_custom_call.1} parent=1 // pred_check_branch
      %17 = sbr.rel (0) target = $region13
    $region12: #{tpu_custom_call.1} parent=1 // pred_region
      _
    $region13: #{tpu_custom_call.1} parent=1 // pred_fallthru
      _
    // Predicated region
    $region14: #{tpu_custom_call.1} parent=1 // pred_check
      _
    $region15: #{tpu_custom_call.1} parent=1 // pred_check_branch
      %19 = sbr.rel (0) target = $region17
    $region16: #{tpu_custom_call.1} parent=1 // pred_region
      _
    $region17: #{tpu_custom_call.1} parent=1 // pred_fallthru
      _
    // Predicated region
    $region18: #{tpu_custom_call.1} parent=1 // pred_check
      _
    $region19: #{tpu_custom_call.1} parent=1 // pred_check_branch
      %21 = sbr.rel (0) target = $region21
    $region20: #{tpu_custom_call.1} parent=1 // pred_region
      _
    $region21: #{tpu_custom_call.1} parent=1 // pred_fallthru
      _
    %v22 = vld [vmem:[%s0] sm:$0xff]
    %v23 = vld [vmem:[%s0 + $0x8] sm:$0xff]
    %v24 = vld [vmem:[%s0 + $0x10] sm:$0xff]
    %v25 = vld [vmem:[%s0 + $0x18] sm:$0xff]
    %v26 = vld [vmem:[%s0 + $0x20] sm:$0xff]
    %v27 = vld [vmem:[%s0 + $0x28] sm:$0xff]
    %v28 = vld [vmem:[%s0 + $0x30] sm:$0xff]
    %v29 = vld [vmem:[%s0 + $0x38] sm:$0xff]
    %v30 = vld [vmem:[%s0 + $0x40] sm:$0xff]
    %v31 = vld [vmem:[%s0 + $0x48] sm:$0xff]
    %v32 = vld [vmem:[%s0 + $0x50] sm:$0xff]
    %v33 = vld [vmem:[%s0 + $0x58] sm:$0xff]
    %v34 = vld [vmem:[%s0 + $0x60] sm:$0xff]
    %v35 = vld [vmem:[%s0 + $0x68] sm:$0xff]
    %v36 = vld [vmem:[%s0 + $0x70] sm:$0xff]
    %v37 = vld [vmem:[%s0 + $0x78] sm:$0xff]
    %v38 = vld [vmem:[%s0 + $0x80] sm:$0xff]
    %v39 = vld [vmem:[%s0 + $0x88] sm:$0xff]
    %v40 = vld [vmem:[%s0 + $0x90] sm:$0xff]
    %v41 = vld [vmem:[%s0 + $0x98] sm:$0xff]
    %v42 = vld [vmem:[%s0 + $0xa0] sm:$0xff]
    %v43 = vld [vmem:[%s0 + $0xa8] sm:$0xff]
    %v44 = vld [vmem:[%s0 + $0xb0] sm:$0xff]
    %v45 = vld [vmem:[%s0 + $0xb8] sm:$0xff]
    %v46 = vld [vmem:[%s0 + $0xc0] sm:$0xff]
    %v47 = vld [vmem:[%s0 + $0xc8] sm:$0xff]
    %v48 = vld [vmem:[%s0 + $0xd0] sm:$0xff]
    %v49 = vld [vmem:[%s0 + $0xd8] sm:$0xff]
    %v50 = vld [vmem:[%s0 + $0xe0] sm:$0xff]
    %v51 = vld [vmem:[%s0 + $0xe8] sm:$0xff]
    %v52 = vld [vmem:[%s0 + $0xf0] sm:$0xff]
    %v53 = vld [vmem:[%s0 + $0xf8] sm:$0xff]
    %v54 = vld [vmem:[%s1] sm:$0xff]
    %v55 = vld [vmem:[%s1 + $0x8] sm:$0xff]
    %v56 = vld [vmem:[%s1 + $0x10] sm:$0xff]
    %v57 = vld [vmem:[%s1 + $0x18] sm:$0xff]
    %v58 = vld [vmem:[%s2] sm:$0x1]
    %v60 = vlaneseq
    %v61 = vshrl.u32 %v60, 7
    %v62 = vsub.s32 0, %v61
    %v63 = vrot.slane %v58, %v62
    %vm65 = vcmask 261120
    %v67 = vsel %vm65, %v22, 0
    %v70 = vsel %vm65, %v23, 0
    %v73 = vsel %vm65, %v24, 0
    %v76 = vsel %vm65, %v25, 0
    %v79 = vsel %vm65, %v26, 0
    %v82 = vsel %vm65, %v27, 0
    %v85 = vsel %vm65, %v28, 0
    %v88 = vsel %vm65, %v29, 0
    %v91 = vsel %vm65, %v30, 0
    %v94 = vsel %vm65, %v31, 0
    %v97 = vsel %vm65, %v32, 0
    %v100 = vsel %vm65, %v33, 0
    %v103 = vsel %vm65, %v34, 0
    %v106 = vsel %vm65, %v35, 0
    %v109 = vsel %vm65, %v36, 0
    %v112 = vsel %vm65, %v37, 0
    %v115 = vsel %vm65, %v38, 0
    %v118 = vsel %vm65, %v39, 0
    %v121 = vsel %vm65, %v40, 0
    %v124 = vsel %vm65, %v41, 0
    %v127 = vsel %vm65, %v42, 0
    %v130 = vsel %vm65, %v43, 0
    %v133 = vsel %vm65, %v44, 0
    %v136 = vsel %vm65, %v45, 0
    %v139 = vsel %vm65, %v46, 0
    %v142 = vsel %vm65, %v47, 0
    %v145 = vsel %vm65, %v48, 0
    %v148 = vsel %vm65, %v49, 0
    %v151 = vsel %vm65, %v50, 0
    %v154 = vsel %vm65, %v51, 0
    %v157 = vsel %vm65, %v52, 0
    %v160 = vsel %vm65, %v53, 0
    %162 = vmatprep.subr.mxu0 0.0
    %163 = vmatpush1.msra.mxu0 0.0
    %164 = vmatprep.subr.mxu0 0.0
    %165 = vmatpush1.msra.mxu0 0.0
    %166 = vmatprep.subr.mxu0 0.0
    %167 = vmatpush1.msra.mxu0 0.0
    %168 = vmatprep.subr.mxu0 0.0
    %169 = vmatpush1.msra.mxu0 0.0
    %170 = vmatprep.subr.mxu0 0.0
    %171 = vmatpush1.msra.mxu0 0.0
    %172 = vmatprep.subr.mxu0 0.0
    %173 = vmatpush1.msra.mxu0 0.0
    %174 = vmatprep.subr.mxu0 0.0
    %175 = vmatpush1.msra.mxu0 0.0
    %176 = vmatprep.subr.mxu0 0.0
    %177 = vmatpush1.msra.mxu0 0.0
    %178 = vmatprep.subr.mxu0 0.0
    %179 = vmatpush1.msra.mxu0 0.0
    %180 = vmatprep.subr.mxu0 0.0
    %181 = vmatpush1.msra.mxu0 0.0
    %182 = vmatprep.subr.mxu0 0.0
    %183 = vmatpush1.msra.mxu0 0.0
    %184 = vmatprep.subr.mxu0 0.0
    %185 = vmatpush1.msra.mxu0 0.0
    %186 = vmatprep.subr.mxu0 0.0
    %187 = vmatpush1.msra.mxu0 %v57
    %188 = vmatprep.subr.mxu0 0.0
    %189 = vmatpush1.msra.mxu0 %v56
    %190 = vmatprep.subr.mxu0 0.0
    %191 = vmatpush1.msra.mxu0 %v55
    %192 = vmatprep.subr.mxu0 0.0
    %193 = vmatpush1.msra.mxu0 %v54
    %194 = vmatprep.subr.mxu0 0.0
    %195 = vmatpush2.msra.mxu0 0.0
    %196 = vmatprep.subr.mxu0 0.0
    %197 = vmatpush2.msra.mxu0 0.0
    %198 = vmatprep.subr.mxu0 0.0
    %199 = vmatpush2.msra.mxu0 0.0
    %200 = vmatprep.subr.mxu0 0.0
    %201 = vmatpush2.msra.mxu0 0.0
    %202 = vmatprep.subr.mxu0 0.0
    %203 = vmatpush2.msra.mxu0 0.0
    %204 = vmatprep.subr.mxu0 0.0
    %205 = vmatpush2.msra.mxu0 0.0
    %206 = vmatprep.subr.mxu0 0.0
    %207 = vmatpush2.msra.mxu0 0.0
    %208 = vmatprep.subr.mxu0 0.0
    %209 = vmatpush2.msra.mxu0 0.0
    %210 = vmatprep.subr.mxu0 0.0
    %211 = vmatpush2.msra.mxu0 0.0
    %212 = vmatprep.subr.mxu0 0.0
    %213 = vmatpush2.msra.mxu0 0.0
    %214 = vmatprep.subr.mxu0 0.0
    %215 = vmatpush2.msra.mxu0 0.0
    %216 = vmatprep.subr.mxu0 0.0
    %217 = vmatpush2.msra.mxu0 0.0
    %218 = vmatprep.subr.mxu0 0.0
    %219 = vmatpush2.msra.mxu0 0.0
    %220 = vmatprep.subr.mxu0 0.0
    %221 = vmatpush2.msra.mxu0 0.0
    %222 = vmatprep.subr.mxu0 0.0
    %223 = vmatpush2.msra.mxu0 0.0
    %224 = vmatprep.subr.mxu0 0.0
    %225 = vmatpush2.msra.mxu0 0.0
    %226 = vmatprep.mubr.f32.mxu0 0.0
    %227 = vmatmul.mubr.f32.gmra.mxu0 %v67
    %v228 = vpop.f32.mrf.mxu0
    %v229 = vadd.f32 %v63, %v228
    %v230 = vpop.f32.mrf.mxu0
    %231 = vmatprep.mubr.f32.mxu0 0.0
    %232 = vmatmul.mubr.f32.gmra.mxu0 %v70
    %v233 = vpop.f32.mrf.mxu0
    %v234 = vadd.f32 %v63, %v233
    %v235 = vpop.f32.mrf.mxu0
    %236 = vmatprep.mubr.f32.mxu0 0.0
    %237 = vmatmul.mubr.f32.gmra.mxu0 %v73
    %v238 = vpop.f32.mrf.mxu0
    %v239 = vadd.f32 %v63, %v238
    %v240 = vpop.f32.mrf.mxu0
    %241 = vmatprep.mubr.f32.mxu0 0.0
    %242 = vmatmul.mubr.f32.gmra.mxu0 %v76
    %v243 = vpop.f32.mrf.mxu0
    %v244 = vadd.f32 %v63, %v243
    %v245 = vpop.f32.mrf.mxu0
    %246 = vmatprep.mubr.f32.mxu0 0.0
    %247 = vmatmul.mubr.f32.gmra.mxu0 %v79
    %v248 = vpop.f32.mrf.mxu0
    %v249 = vadd.f32 %v63, %v248
    %v250 = vpop.f32.mrf.mxu0
    %251 = vmatprep.mubr.f32.mxu0 0.0
    %252 = vmatmul.mubr.f32.gmra.mxu0 %v82
    %v253 = vpop.f32.mrf.mxu0
    %v254 = vadd.f32 %v63, %v253
    %v255 = vpop.f32.mrf.mxu0
    %256 = vmatprep.mubr.f32.mxu0 0.0
    %257 = vmatmul.mubr.f32.gmra.mxu0 %v85
    %v258 = vpop.f32.mrf.mxu0
    %v259 = vadd.f32 %v63, %v258
    %v260 = vpop.f32.mrf.mxu0
    %261 = vmatprep.mubr.f32.mxu0 0.0
    %262 = vmatmul.mubr.f32.gmra.mxu0 %v88
    %v263 = vpop.f32.mrf.mxu0
    %v264 = vadd.f32 %v63, %v263
    %v265 = vpop.f32.mrf.mxu0
    %266 = vmatprep.mubr.f32.mxu0 0.0
    %267 = vmatmul.mubr.f32.gmra.mxu0 %v91
    %v268 = vpop.f32.mrf.mxu0
    %v269 = vadd.f32 %v63, %v268
    %v270 = vpop.f32.mrf.mxu0
    %271 = vmatprep.mubr.f32.mxu0 0.0
    %272 = vmatmul.mubr.f32.gmra.mxu0 %v94
    %v273 = vpop.f32.mrf.mxu0
    %v274 = vadd.f32 %v63, %v273
    %v275 = vpop.f32.mrf.mxu0
    %276 = vmatprep.mubr.f32.mxu0 0.0
    %277 = vmatmul.mubr.f32.gmra.mxu0 %v97
    %v278 = vpop.f32.mrf.mxu0
    %v279 = vadd.f32 %v63, %v278
    %v280 = vpop.f32.mrf.mxu0
    %281 = vmatprep.mubr.f32.mxu0 0.0
    %282 = vmatmul.mubr.f32.gmra.mxu0 %v100
    %v283 = vpop.f32.mrf.mxu0
    %v284 = vadd.f32 %v63, %v283
    %v285 = vpop.f32.mrf.mxu0
    %286 = vmatprep.mubr.f32.mxu0 0.0
    %287 = vmatmul.mubr.f32.gmra.mxu0 %v103
    %v288 = vpop.f32.mrf.mxu0
    %v289 = vadd.f32 %v63, %v288
    %v290 = vpop.f32.mrf.mxu0
    %291 = vmatprep.mubr.f32.mxu0 0.0
    %292 = vmatmul.mubr.f32.gmra.mxu0 %v106
    %v293 = vpop.f32.mrf.mxu0
    %v294 = vadd.f32 %v63, %v293
    %v295 = vpop.f32.mrf.mxu0
    %296 = vmatprep.mubr.f32.mxu0 0.0
    %297 = vmatmul.mubr.f32.gmra.mxu0 %v109
    %v298 = vpop.f32.mrf.mxu0
    %v299 = vadd.f32 %v63, %v298
    %v300 = vpop.f32.mrf.mxu0
    %301 = vmatprep.mubr.f32.mxu0 0.0
    %302 = vmatmul.mubr.f32.gmra.mxu0 %v112
    %v303 = vpop.f32.mrf.mxu0
    %v304 = vadd.f32 %v63, %v303
    %v305 = vpop.f32.mrf.mxu0
    %306 = vmatprep.mubr.f32.mxu0 0.0
    %307 = vmatmul.mubr.f32.gmra.mxu0 %v115
    %v308 = vpop.f32.mrf.mxu0
    %v309 = vadd.f32 %v63, %v308
    %v310 = vpop.f32.mrf.mxu0
    %311 = vmatprep.mubr.f32.mxu0 0.0
    %312 = vmatmul.mubr.f32.gmra.mxu0 %v118
    %v313 = vpop.f32.mrf.mxu0
    %v314 = vadd.f32 %v63, %v313
    %v315 = vpop.f32.mrf.mxu0
    %316 = vmatprep.mubr.f32.mxu0 0.0
    %317 = vmatmul.mubr.f32.gmra.mxu0 %v121
    %v318 = vpop.f32.mrf.mxu0
    %v319 = vadd.f32 %v63, %v318
    %v320 = vpop.f32.mrf.mxu0
    %321 = vmatprep.mubr.f32.mxu0 0.0
    %322 = vmatmul.mubr.f32.gmra.mxu0 %v124
    %v323 = vpop.f32.mrf.mxu0
    %v324 = vadd.f32 %v63, %v323
    %v325 = vpop.f32.mrf.mxu0
    %326 = vmatprep.mubr.f32.mxu0 0.0
    %327 = vmatmul.mubr.f32.gmra.mxu0 %v127
    %v328 = vpop.f32.mrf.mxu0
    %v329 = vadd.f32 %v63, %v328
    %v330 = vpop.f32.mrf.mxu0
    %331 = vmatprep.mubr.f32.mxu0 0.0
    %332 = vmatmul.mubr.f32.gmra.mxu0 %v130
    %v333 = vpop.f32.mrf.mxu0
    %v334 = vadd.f32 %v63, %v333
    %v335 = vpop.f32.mrf.mxu0
    %336 = vmatprep.mubr.f32.mxu0 0.0
    %337 = vmatmul.mubr.f32.gmra.mxu0 %v133
    %v338 = vpop.f32.mrf.mxu0
    %v339 = vadd.f32 %v63, %v338
    %v340 = vpop.f32.mrf.mxu0
    %341 = vmatprep.mubr.f32.mxu0 0.0
    %342 = vmatmul.mubr.f32.gmra.mxu0 %v136
    %v343 = vpop.f32.mrf.mxu0
    %v344 = vadd.f32 %v63, %v343
    %v345 = vpop.f32.mrf.mxu0
    %346 = vmatprep.mubr.f32.mxu0 0.0
    %347 = vmatmul.mubr.f32.gmra.mxu0 %v139
    %v348 = vpop.f32.mrf.mxu0
    %v349 = vadd.f32 %v63, %v348
    %v350 = vpop.f32.mrf.mxu0
    %351 = vmatprep.mubr.f32.mxu0 0.0
    %352 = vmatmul.mubr.f32.gmra.mxu0 %v142
    %v353 = vpop.f32.mrf.mxu0
    %v354 = vadd.f32 %v63, %v353
    %v355 = vpop.f32.mrf.mxu0
    %356 = vmatprep.mubr.f32.mxu0 0.0
    %357 = vmatmul.mubr.f32.gmra.mxu0 %v145
    %v358 = vpop.f32.mrf.mxu0
    %v359 = vadd.f32 %v63, %v358
    %v360 = vpop.f32.mrf.mxu0
    %361 = vmatprep.mubr.f32.mxu0 0.0
    %362 = vmatmul.mubr.f32.gmra.mxu0 %v148
    %v363 = vpop.f32.mrf.mxu0
    %v364 = vadd.f32 %v63, %v363
    %v365 = vpop.f32.mrf.mxu0
    %366 = vmatprep.mubr.f32.mxu0 0.0
    %367 = vmatmul.mubr.f32.gmra.mxu0 %v151
    %v368 = vpop.f32.mrf.mxu0
    %v369 = vadd.f32 %v63, %v368
    %v370 = vpop.f32.mrf.mxu0
    %371 = vmatprep.mubr.f32.mxu0 0.0
    %372 = vmatmul.mubr.f32.gmra.mxu0 %v154
    %v373 = vpop.f32.mrf.mxu0
    %v374 = vadd.f32 %v63, %v373
    %v375 = vpop.f32.mrf.mxu0
    %376 = vmatprep.mubr.f32.mxu0 0.0
    %377 = vmatmul.mubr.f32.gmra.mxu0 %v157
    %v378 = vpop.f32.mrf.mxu0
    %v379 = vadd.f32 %v63, %v378
    %v380 = vpop.f32.mrf.mxu0
    %381 = vmatprep.mubr.f32.mxu0 0.0
    %382 = vmatmul.mubr.f32.gmra.mxu0 %v160
    %v383 = vpop.f32.mrf.mxu0
    %v384 = vadd.f32 %v63, %v383
    %v385 = vpop.f32.mrf.mxu0
    %386 = vdwg.mxu0
    %v387 = vmax.f32 %v229, 0.0
    %v388 = vmax.f32 %v234, 0.0
    %v389 = vmax.f32 %v239, 0.0
    %v390 = vmax.f32 %v244, 0.0
    %v391 = vmax.f32 %v249, 0.0
    %v392 = vmax.f32 %v254, 0.0
    %v393 = vmax.f32 %v259, 0.0
    %v394 = vmax.f32 %v264, 0.0
    %v395 = vmax.f32 %v269, 0.0
    %v396 = vmax.f32 %v274, 0.0
    %v397 = vmax.f32 %v279, 0.0
    %v398 = vmax.f32 %v284, 0.0
    %v399 = vmax.f32 %v289, 0.0
    %v400 = vmax.f32 %v294, 0.0
    %v401 = vmax.f32 %v299, 0.0
    %v402 = vmax.f32 %v304, 0.0
    %v403 = vmax.f32 %v309, 0.0
    %v404 = vmax.f32 %v314, 0.0
    %v405 = vmax.f32 %v319, 0.0
    %v406 = vmax.f32 %v324, 0.0
    %v407 = vmax.f32 %v329, 0.0
    %v408 = vmax.f32 %v334, 0.0
    %v409 = vmax.f32 %v339, 0.0
    %v410 = vmax.f32 %v344, 0.0
    %v411 = vmax.f32 %v349, 0.0
    %v412 = vmax.f32 %v354, 0.0
    %v413 = vmax.f32 %v359, 0.0
    %v414 = vmax.f32 %v364, 0.0
    %v415 = vmax.f32 %v369, 0.0
    %v416 = vmax.f32 %v374, 0.0
    %v417 = vmax.f32 %v379, 0.0
    %v418 = vmax.f32 %v384, 0.0
    %v419 = vld [vmem:[%s3] sm:$0x1]
    %s420 = sld [smem:[#allocation2]]
    %v421 = vstv %s420
    %422 = vmatprep.subr.mxu0 0.0
    %423 = vmatpush1.xpose.msra.mxu0 %v402
    %424 = vmatprep.subr.mxu0 0.0
    %425 = vmatpush1.xpose.msra.mxu0 %v401
    %426 = vmatprep.subr.mxu0 0.0
    %427 = vmatpush1.xpose.msra.mxu0 %v400
    %428 = vmatprep.subr.mxu0 0.0
    %429 = vmatpush1.xpose.msra.mxu0 %v399
    %430 = vmatprep.subr.mxu0 0.0
    %431 = vmatpush1.xpose.msra.mxu0 %v398
    %432 = vmatprep.subr.mxu0 0.0
    %433 = vmatpush1.xpose.msra.mxu0 %v397
    %434 = vmatprep.subr.mxu0 0.0
    %435 = vmatpush1.xpose.msra.mxu0 %v396
    %436 = vmatprep.subr.mxu0 0.0
    %437 = vmatpush1.xpose.msra.mxu0 %v395
    %438 = vmatprep.subr.mxu0 0.0
    %439 = vmatpush1.xpose.msra.mxu0 %v394
    %440 = vmatprep.subr.mxu0 0.0
    %441 = vmatpush1.xpose.msra.mxu0 %v393
    %442 = vmatprep.subr.mxu0 0.0
    %443 = vmatpush1.xpose.msra.mxu0 %v392
    %444 = vmatprep.subr.mxu0 0.0
    %445 = vmatpush1.xpose.msra.mxu0 %v391
    %446 = vmatprep.subr.mxu0 0.0
    %447 = vmatpush1.xpose.msra.mxu0 %v390
    %448 = vmatprep.subr.mxu0 0.0
    %449 = vmatpush1.xpose.msra.mxu0 %v389
    %450 = vmatprep.subr.mxu0 0.0
    %451 = vmatpush1.xpose.msra.mxu0 %v388
    %452 = vmatprep.subr.mxu0 0.0
    %453 = vmatpush1.xpose.msra.mxu0 %v387
    %454 = vmatprep.subr.mxu0 0.0
    %455 = vmatpush2.xpose.msra.mxu0 %v418
    %456 = vmatprep.subr.mxu0 0.0
    %457 = vmatpush2.xpose.msra.mxu0 %v417
    %458 = vmatprep.subr.mxu0 0.0
    %459 = vmatpush2.xpose.msra.mxu0 %v416
    %460 = vmatprep.subr.mxu0 0.0
    %461 = vmatpush2.xpose.msra.mxu0 %v415
    %462 = vmatprep.subr.mxu0 0.0
    %463 = vmatpush2.xpose.msra.mxu0 %v414
    %464 = vmatprep.subr.mxu0 0.0
    %465 = vmatpush2.xpose.msra.mxu0 %v413
    %466 = vmatprep.subr.mxu0 0.0
    %467 = vmatpush2.xpose.msra.mxu0 %v412
    %468 = vmatprep.subr.mxu0 0.0
    %469 = vmatpush2.xpose.msra.mxu0 %v411
    %470 = vmatprep.subr.mxu0 0.0
    %471 = vmatpush2.xpose.msra.mxu0 %v410
    %472 = vmatprep.subr.mxu0 0.0
    %473 = vmatpush2.xpose.msra.mxu0 %v409
    %474 = vmatprep.subr.mxu0 0.0
    %475 = vmatpush2.xpose.msra.mxu0 %v408
    %476 = vmatprep.subr.mxu0 0.0
    %477 = vmatpush2.xpose.msra.mxu0 %v407
    %478 = vmatprep.subr.mxu0 0.0
    %479 = vmatpush2.xpose.msra.mxu0 %v406
    %480 = vmatprep.subr.mxu0 0.0
    %481 = vmatpush2.xpose.msra.mxu0 %v405
    %482 = vmatprep.subr.mxu0 0.0
    %483 = vmatpush2.xpose.msra.mxu0 %v404
    %484 = vmatprep.subr.mxu0 0.0
    %485 = vmatpush2.xpose.msra.mxu0 %v403
    %486 = vmatprep.mubr.f32.mxu0 0.0
    %487 = vmatmul.mubr.f32.gmra.mxu0 %v419
    %v488 = vpop.f32.mrf.mxu0
    %v489 = vadd.f32 %v421, %v488
    %v490 = vpop.f32.mrf.mxu0
    %v491 = vadd.f32 %v421, %v490
    %492 = vdwg.mxu0
    %v493 = vxor.u32 %v489, 2147483648
    %v494 = vxor.u32 %v491, 2147483648
    %v495 = vmul.f32 %v493, 1.442695
    %v496 = vpow.pop %v495
    %v497 = vmul.f32 %v494, 1.442695
    %v498 = vpow.pop %v497
    %v499 = vadd.f32 %v496, 1.0
    %v500 = vadd.f32 %v498, 1.0
    %v501 = vrcp.pop %v499
    %v502 = vmul.f32 1.0, %v501
    %v503 = vrcp.pop %v500
    %v504 = vmul.f32 1.0, %v503
    %v507 = vcombine.low %v502, %v504
    %v509 = vunpack.c.l.s4 1966171168
    %v510 = vunpack.c.0.s8 %v509
    %v511 = vlaneseq
    %v512 = vshrl.u32 %v511, 7
    %v513 = vsub.s32 %v510, %v512
    %v514 = vrot.slane %v507, %v513
    %v516 = vunpack.c.l.s4 1966171168
    %v517 = vunpack.c.0.s8 %v516
    %v518 = vlaneseq
    %v519 = vshrl.u32 %v518, 7
    %v520 = vsub.s32 %v517, %v519
    %v521 = vrot.slane %v514, %v520
    %v523 = vlaneseq
    %vm524 = vcmp.ge.s32.totalorder %v523, 0
    %vm525 = vcmp.lt.s32.totalorder %v523, 256
    %vm526 = vmand %vm524, %vm525
    %527 = vst.msk [vmem:[#allocation3] sm:$0x3] %vm526, %v521
    // Predicated region
    $region22: #{tpu_custom_call.1} parent=1 // pred_check
      _
    $region23: #{tpu_custom_call.1} parent=1 // pred_check_branch
      %529 = sbr.rel (0) target = $region25
    $region24: #{tpu_custom_call.1} parent=1 // pred_region
      %s531 = ssub.s32 32, 32
      %532 = vsyncadd [#allocation4], %s531
      %s534 = sshll.u32 [#allocation3], 4
      %s535 = int_to_ptr.vmem [resolvable:$true] %s534
      %537 = dma.vmem_to_hbm [thread:$0]  %s535, 32, %s5, [#allocation4]
    $region25: #{tpu_custom_call.1} parent=1 // pred_fallthru
      _
    // Predicated region
    $region26: #{tpu_custom_call.1} parent=1 // pred_check
      _
    $region27: #{tpu_custom_call.1} parent=1 // pred_check_branch
      %539 = sbr.rel (0) target = $region29
    $region28: #{tpu_custom_call.1} parent=1 // pred_region
      %540 = dma.done [#allocation4], 32
    $region29: #{tpu_custom_call.1} parent=1 // pred_fallthru
      _
    %541 = vsyncpa [#allocation4], 1

</llo_original>
